<compile_context>
chip_gen: v7x
topology: tpu7x:2x2x1
jax: 0.10.0
libtpu: 0.0.40
codegen_flags: <defaults>
</compile_context>

<pallas_src>
import functools

import jax
import jax.numpy as jnp
import numpy as np
from jax.experimental import pallas as pl
from jax.experimental.pallas import tpu as pltpu


def _gcn_encoder_kernel(x_ref, adj_ref, w1_ref, w2_ref, out_ref):
    """One chunk of graphs per grid step, packed along rows.

    x_ref   : (BN, F)    node features of the whole chunk (BN = graphs*N rows)
    adj_ref : (BN, BN)   block-diagonal adjacency of the chunk
    w1_ref  : (F, H)     conv1 weight (resident in VMEM)
    w2_ref  : (H, Opad)  conv2 weight, zero-padded to a lane-dense width
    out_ref : (BN, Opad) lane-dense output slab
    """
    x = x_ref[...]
    adj = adj_ref[...]
    cd = x.dtype  # compute dtype (bf16 by default)

    # ---- GraphConv 1: (adj @ x) @ W1, then ReLU (same op order as torch) ----
    ax = jnp.dot(adj, x, preferred_element_type=jnp.float32)              # (BN, F)
    h = jnp.dot(ax.astype(cd), w1_ref[...],
                preferred_element_type=jnp.float32)                        # (BN, H)
    h = jnp.maximum(h, 0.0)

    # ---- GraphConv 2: (adj @ h) @ W2 ----
    ah = jnp.dot(adj, h.astype(cd), preferred_element_type=jnp.float32)    # (BN, H)
    y = jnp.dot(ah.astype(cd), w2_ref[...],
                preferred_element_type=jnp.float32)                        # (BN, Opad)

    # Single unmasked, lane-dense store (last dim is a multiple of 128).
    out_ref[...] = y.astype(out_ref.dtype)


def _round_up(v, m):
    return ((v + m - 1) // m) * m


@functools.partial(jax.jit, static_argnames=("compute_dtype",))
def gcn_encoder_forward(x, adj, w1, w2, compute_dtype=jnp.bfloat16):
    """x: (B, N, F), adj: (B, N, N), w1: (F, H), w2: (H, O) -> (B, N, O) f32."""
    B, N, F = x.shape
    H = w1.shape[1]
    O = w2.shape[1]

    # At most two "parallel" chunks so both v7x TensorCores are used; on
    # v5e/v6e (1 TC) the extra step is negligible.  Fall back to one chunk if
    # the per-chunk row count would break the (8, 128) block constraint.
    num_chunks = 2 if (B >= 2 and B % 2 == 0 and ((B // 2) * N) % 8 == 0) else 1
    Bc = B // num_chunks          # graphs per chunk
    BN = Bc * N                   # rows per chunk (graphs packed along sublanes)

    O_pad = _round_up(max(O, 128), 128)   # lane-dense output width
    cd = compute_dtype

    # Pack node features of each chunk along rows: (B*N, F).
    x2d = x.reshape(B * N, F).astype(cd)

    # Block-diagonal adjacency per chunk: adj_bd @ x2d == per-graph adj @ x
    # exactly (off-diagonal blocks are exact zeros), but as ONE tall matmul.
    adj_c = adj.reshape(num_chunks, Bc, N, N)
    eye = jnp.eye(Bc, dtype=adj.dtype)
    adj_bd = jnp.einsum("cbij,bd->cbidj", adj_c, eye)
    adj_bd = adj_bd.reshape(num_chunks * BN, BN).astype(cd)

    w1c = w1.astype(cd)
    w2c = w2.astype(cd)
    if O_pad != O:
        w2c = jnp.concatenate([w2c, jnp.zeros((H, O_pad - O), dtype=cd)], axis=1)

    out = pl.pallas_call(
        _gcn_encoder_kernel,
        out_shape=jax.ShapeDtypeStruct((B * N, O_pad), jnp.float32),
        grid_spec=pltpu.PrefetchScalarGridSpec(
            num_scalar_prefetch=0,
            grid=(num_chunks,),
            in_specs=[
                pl.BlockSpec((BN, F), lambda c: (c, 0)),      # chunk node features
                pl.BlockSpec((BN, BN), lambda c: (c, 0)),     # chunk block-diag adj
                pl.BlockSpec((F, H), lambda c: (0, 0)),       # W1: resident in VMEM
                pl.BlockSpec((H, O_pad), lambda c: (0, 0)),   # W2: resident in VMEM
            ],
            out_specs=pl.BlockSpec((BN, O_pad), lambda c: (c, 0)),
        ),
        compiler_params=pltpu.CompilerParams(
            dimension_semantics=("parallel",),   # chunks are independent graphs
        ),
    )(x2d, adj_bd, w1c, w2c)

    # Strip the lane padding and restore (B, N, O) -- pure layout plumbing.
    return out[:, :O].reshape(B, N, O)


def _xavier_uniform(key, shape, gain):
    """torch.nn.init.xavier_uniform on a 2-D tensor (symmetric in fan_in/out)."""
    fan_a, fan_b = shape
    limit = gain * np.sqrt(6.0 / (fan_a + fan_b))
    return jax.random.uniform(key, shape, jnp.float32, -limit, limit)


def reference_forward(x, adj, w1, w2, compute_dtype=jnp.float32):
    """Pure-JAX mirror of the torch forward (same matmul associativity),
    optionally with the same bf16-operand / f32-accumulate pattern as the
    kernel so it can be checked tightly."""
    cd = compute_dtype
    adj_c = adj.astype(cd)
    ax = jnp.einsum("bij,bjf->bif", adj_c, x.astype(cd),
                    preferred_element_type=jnp.float32)
    h = jnp.einsum("bnf,fh->bnh", ax.astype(cd), w1.astype(cd),
                   preferred_element_type=jnp.float32)
    h = jnp.maximum(h, 0.0)
    ah = jnp.einsum("bij,bjh->bih", adj_c, h.astype(cd),
                    preferred_element_type=jnp.float32)
    y = jnp.einsum("bnh,ho->bno", ah.astype(cd), w2.astype(cd),
                   preferred_element_type=jnp.float32)
    return y


if __name__ == "__main__":
    # Small shapes consistent with the module: a batch of small graphs.
    batch_size, num_nodes = 8, 16
    input_dim, hidden_dim, output_dim = 16, 32, 16

    key = jax.random.PRNGKey(0)
    k_w1, k_w2, k_x, k_a = jax.random.split(key, 4)

    gain_relu = float(np.sqrt(2.0))  # nn.init.calculate_gain('relu')
    w1 = _xavier_uniform(k_w1, (input_dim, hidden_dim), gain_relu)
    w2 = _xavier_uniform(k_w2, (hidden_dim, output_dim), gain_relu)

    x = jax.random.normal(k_x, (batch_size, num_nodes, input_dim), jnp.float32)

    # Deterministic symmetric 0/1 adjacency with self-loops (exact in bf16).
    rand = jax.random.uniform(k_a, (batch_size, num_nodes, num_nodes))
    a = (rand > 0.5).astype(jnp.float32)
    adj = jnp.minimum(a + jnp.swapaxes(a, 1, 2) + jnp.eye(num_nodes)[None], 1.0)

    y = gcn_encoder_forward(x, adj, w1, w2)
    jax.block_until_ready(y)

    # Tight check against a pure-JAX mirror that uses the identical cast
    # pattern (bf16 operands, f32 accumulate) -- should be essentially exact.
    y_mixed = reference_forward(x, adj, w1, w2, compute_dtype=jnp.bfloat16)
    np.testing.assert_allclose(np.asarray(y), np.asarray(y_mixed),
                               rtol=1e-3, atol=1e-2)

    # Loose sanity check against the full-f32 torch-equivalent forward
    # (bf16 operand rounding is the only difference).
    y_f32 = np.asarray(reference_forward(x, adj, w1, w2,
                                         compute_dtype=jnp.float32))
    scale = float(np.max(np.abs(y_f32))) + 1e-6
    assert float(np.max(np.abs(np.asarray(y) - y_f32))) / scale < 0.05

    print("KERNEL_OK")
</pallas_src>

<mosaic_0001>
module attributes {stable_mosaic.version = 11 : i64} {
  func.func @_gcn_encoder_kernel(%arg0: i32, %arg1: memref<64x16xbf16, #tpu.memory_space<vmem>>, %arg2: memref<64x64xbf16, #tpu.memory_space<vmem>>, %arg3: memref<16x32xbf16, #tpu.memory_space<vmem>>, %arg4: memref<32x128xbf16, #tpu.memory_space<vmem>>, %arg5: memref<64x128xf32, #tpu.memory_space<vmem>>) attributes {dimension_semantics = [#tpu.dimension_semantics<parallel>], iteration_bounds = array<i64: 2>, scalar_prefetch = 0 : i64, scratch_operands = 0 : i64, tpu.core_type = #tpu.core_type<tc>, window_params = [{transform_indices = @transform_0, window_bounds = array<i64: 64, 16>}, {transform_indices = @transform_1, window_bounds = array<i64: 64, 64>}, {pipeline_mode = #tpu.pipeline_mode<synchronous>, transform_indices = @transform_2, window_bounds = array<i64: 16, 32>}, {pipeline_mode = #tpu.pipeline_mode<synchronous>, transform_indices = @transform_3, window_bounds = array<i64: 32, 128>}, {transform_indices = @transform_4, window_bounds = array<i64: 64, 128>}]} {
    %c0 = arith.constant 0 : index
    %c0_0 = arith.constant 0 : index
    %0 = vector.load %arg1[%c0, %c0_0] : memref<64x16xbf16, #tpu.memory_space<vmem>>, vector<64x16xbf16>
    %c0_1 = arith.constant 0 : index
    %c0_2 = arith.constant 0 : index
    %1 = vector.load %arg2[%c0_1, %c0_2] : memref<64x64xbf16, #tpu.memory_space<vmem>>, vector<64x64xbf16>
    %cst = arith.constant dense<0.000000e+00> : vector<64x16xf32>
    %2 = tpu.matmul %1, %0, %cst {dimension_numbers = #tpu.dot_dimension_numbers<[1], [0], [0], [1], [0, 0, 1, 1], [], []>} : vector<64x64xbf16>, vector<64x16xbf16>, vector<64x16xf32> -> vector<64x16xf32>
    %3 = arith.truncf %2 : vector<64x16xf32> to vector<64x16xbf16>
    %c0_3 = arith.constant 0 : index
    %c0_4 = arith.constant 0 : index
    %4 = vector.load %arg3[%c0_3, %c0_4] : memref<16x32xbf16, #tpu.memory_space<vmem>>, vector<16x32xbf16>
    %cst_5 = arith.constant dense<0.000000e+00> : vector<64x32xf32>
    %5 = tpu.matmul %3, %4, %cst_5 {dimension_numbers = #tpu.dot_dimension_numbers<[1], [0], [0], [1], [0, 0, 1, 1], [], []>} : vector<64x16xbf16>, vector<16x32xbf16>, vector<64x32xf32> -> vector<64x32xf32>
    %cst_6 = arith.constant 0.000000e+00 : f32
    %6 = vector.broadcast %cst_6 : f32 to vector<64x32xf32>
    %7 = arith.maximumf %5, %6 : vector<64x32xf32>
    %8 = arith.truncf %7 : vector<64x32xf32> to vector<64x32xbf16>
    %cst_7 = arith.constant dense<0.000000e+00> : vector<64x32xf32>
    %9 = tpu.matmul %1, %8, %cst_7 {dimension_numbers = #tpu.dot_dimension_numbers<[1], [0], [0], [1], [0, 0, 1, 1], [], []>} : vector<64x64xbf16>, vector<64x32xbf16>, vector<64x32xf32> -> vector<64x32xf32>
    %10 = arith.truncf %9 : vector<64x32xf32> to vector<64x32xbf16>
    %c0_8 = arith.constant 0 : index
    %c0_9 = arith.constant 0 : index
    %11 = vector.load %arg4[%c0_8, %c0_9] : memref<32x128xbf16, #tpu.memory_space<vmem>>, vector<32x128xbf16>
    %cst_10 = arith.constant dense<0.000000e+00> : vector<64x128xf32>
    %12 = tpu.matmul %10, %11, %cst_10 {dimension_numbers = #tpu.dot_dimension_numbers<[1], [0], [0], [1], [0, 0, 1, 1], [], []>} : vector<64x32xbf16>, vector<32x128xbf16>, vector<64x128xf32> -> vector<64x128xf32>
    %c0_11 = arith.constant 0 : index
    %c0_12 = arith.constant 0 : index
    %13 = vector.load %arg5[%c0_11, %c0_12] : memref<64x128xf32, #tpu.memory_space<vmem>>, vector<64x128xf32>
    tpu.vector_store %arg5[%c0_11, %c0_12], %12 {strides = array<i32>} : memref<64x128xf32, #tpu.memory_space<vmem>>, vector<64x128xf32>,
    return
  }
  func.func @transform_0(%arg0: i32) -> (i32, i32) {
    %c0_i32 = arith.constant 0 : i32
    %c0_i32_0 = arith.constant 0 : i32
    return %arg0, %c0_i32 : i32, i32
  }
  func.func @transform_1(%arg0: i32) -> (i32, i32) {
    %c0_i32 = arith.constant 0 : i32
    %c0_i32_0 = arith.constant 0 : i32
    return %arg0, %c0_i32 : i32, i32
  }
  func.func @transform_2(%arg0: i32) -> (i32, i32) {
    %c0_i32 = arith.constant 0 : i32
    %c0_i32_0 = arith.constant 0 : i32
    %c0_i32_1 = arith.constant 0 : i32
    return %c0_i32, %c0_i32_0 : i32, i32
  }
  func.func @transform_3(%arg0: i32) -> (i32, i32) {
    %c0_i32 = arith.constant 0 : i32
    %c0_i32_0 = arith.constant 0 : i32
    %c0_i32_1 = arith.constant 0 : i32
    return %c0_i32, %c0_i32_0 : i32, i32
  }
  func.func @transform_4(%arg0: i32) -> (i32, i32) {
    %c0_i32 = arith.constant 0 : i32
    %c0_i32_0 = arith.constant 0 : i32
    return %arg0, %c0_i32 : i32, i32
  }
}

</mosaic_0001>

<llo_original>
// kernel: gcn_encoder_forward.1
$region0: #{gcn_encoder_forward.1}
  #allocation0 [shape = 'u32[]', space=smem, size = 0x4, offset = 0x4, fixed_abs, tag = 'smem constant byte address 0x4 - core index']
  #allocation1 [shape = 'u32[144,128]{1,0:T(1,128)}', space=vmem, size = 0x12000, scoped, tag = 'internal scratch']
  %s0 = inlined_call_operand.vmem [shape: bf16[128,16], index: 0, kind: input, shape index: {}]
  %s1 = inlined_call_operand.vmem [shape: bf16[128,64], index: 1, kind: input, shape index: {}]
  %s2 = inlined_call_operand.vmem [shape: bf16[16,32], index: 2, kind: input, shape index: {}]
  %s3 = inlined_call_operand.vmem [shape: bf16[32,128], index: 3, kind: input, shape index: {}]
  %s4 = inlined_call_operand.hbm [shape: f32[128,128], index: 4, kind: output, shape index: {}]
  %s5 = sld [smem:[#allocation0]]
  $region49: #{gcn_encoder_forward.1} parent=0
    _
  %s7 = ssub.s32 1, %s5
  %s8 = scalar_select 0, %s7, %s5
  $region1: #{gcn_encoder_forward.1} parent=0
    #allocation2 [shape = 'u8[65536]{0}', space=vmem, size = 0x10000, scoped, tag = 'output window, operand 0']
    #allocation3 [shape = 's32[2]{0}', space=sflag, size = 0x8, scoped, tag = 'scoped memory for gcn_encoder_forward.1']
    %9 = vsyncpa [#allocation3], 0
    %s10 = scalar_lea.sflag [#allocation3], 1
    %11 = vsyncpa %s10, 0
    loop: start=0, step=1, limit=4
    $region2: #{gcn_encoder_forward.1} parent=1 // loop_pre_header
      _
    $region3: #{gcn_encoder_forward.1} parent=1 // loop_header
      %s13 = sphi 0, %s17
      %p14 = scmp.ge.s32.totalorder %s13, 4
      %s23 = sphi 0, %s25
      %s26 = sphi 0, %s23
      %s27 = sphi 0, %s26
      %s43 = sphi 0, %s27
      %s49 = sphi 0, %s51
      %s52 = sphi 0, %s49
      %s53 = sphi 0, %s52
      %s69 = sphi 0, %s53
      %s73 = sphi 0, %s73
      %s75 = sphi 0, %s73
      %s76 = sphi 0, %s75
      %s90 = sphi 0, %s76
      %s94 = sphi 0, %s94
      %s96 = sphi 0, %s94
      %s97 = sphi 0, %s96
      %s111 = sphi 0, %s97
      %s117 = sphi 0, %s119
      %s120 = sphi 0, %s117
      %s121 = sphi 0, %s120
      %s137 = sphi 0, %s121
    $region4: #{gcn_encoder_forward.1} parent=1 // loop_header_branch
      %16 = sbr.rel (%p14) target = $region8
    $region5: #{gcn_encoder_forward.1} parent=1 // loop_body
      %s18 = ssub.s32 %s13, 1
      %s19 = ssub.s32 %s13, 2
      %s20 = sadd.s32 %s13, 1
      %s21 = ssub.s32 %s13, %s20
      %p22 = scmp.eq.s32.totalorder %s21, 0
      %s24 = sadd.s32 %s23, 1
      %s25 = scalar_select %p22, %s23, %s24
      %p28 = pneg %p22
      %p29 = scmp.eq.s32.totalorder %s13, 1
      %p30 = por %p28, %p29
      %p31 = scmp.ne.s32.totalorder %s23, %s26
      %p32 = scmp.eq.s32.totalorder %s13, 0
      %p33 = por %p31, %p32
      %p34 = scmp.ne.s32.totalorder %s23, %s26
      %p35 = scmp.eq.s32.totalorder %s18, 1
      %p36 = por %p34, %p35
      %p37 = scmp.ne.s32.totalorder %s26, %s27
      %p38 = scmp.eq.s32.totalorder %s18, 0
      %p39 = por %p37, %p38
      %p40 = scmp.ne.s32.totalorder %s26, %s27
      %p41 = scmp.eq.s32.totalorder %s19, 1
      %p42 = por %p40, %p41
      %p44 = scmp.ne.s32.totalorder %s27, %s43
      %p45 = scmp.eq.s32.totalorder %s19, 0
      %p46 = por %p44, %p45
      %s47 = ssub.s32 %s13, %s20
      %p48 = scmp.eq.s32.totalorder %s47, 0
      %s50 = sadd.s32 %s49, 1
      %s51 = scalar_select %p48, %s49, %s50
      %p54 = pneg %p48
      %p55 = scmp.eq.s32.totalorder %s13, 1
      %p56 = por %p54, %p55
      %p57 = scmp.ne.s32.totalorder %s49, %s52
      %p58 = scmp.eq.s32.totalorder %s13, 0
      %p59 = por %p57, %p58
      %p60 = scmp.ne.s32.totalorder %s49, %s52
      %p61 = scmp.eq.s32.totalorder %s18, 1
      %p62 = por %p60, %p61
      %p63 = scmp.ne.s32.totalorder %s52, %s53
      %p64 = scmp.eq.s32.totalorder %s18, 0
      %p65 = por %p63, %p64
      %p66 = scmp.ne.s32.totalorder %s52, %s53
      %p67 = scmp.eq.s32.totalorder %s19, 1
      %p68 = por %p66, %p67
      %p70 = scmp.ne.s32.totalorder %s53, %s69
      %p71 = scmp.eq.s32.totalorder %s19, 0
      %p72 = por %p70, %p71
      %s74 = sadd.s32 %s73, 1
      %p77 = scmp.eq.s32.totalorder %s13, 1
      %p78 = scmp.ne.s32.totalorder %s73, %s75
      %p79 = scmp.eq.s32.totalorder %s13, 0
      %p80 = por %p78, %p79
      %p81 = scmp.ne.s32.totalorder %s73, %s75
      %p82 = scmp.eq.s32.totalorder %s18, 1
      %p83 = por %p81, %p82
      %p84 = scmp.ne.s32.totalorder %s75, %s76
      %p85 = scmp.eq.s32.totalorder %s18, 0
      %p86 = por %p84, %p85
      %p87 = scmp.ne.s32.totalorder %s75, %s76
      %p88 = scmp.eq.s32.totalorder %s19, 1
      %p89 = por %p87, %p88
      %p91 = scmp.ne.s32.totalorder %s76, %s90
      %p92 = scmp.eq.s32.totalorder %s19, 0
      %p93 = por %p91, %p92
      %s95 = sadd.s32 %s94, 1
      %p98 = scmp.eq.s32.totalorder %s13, 1
      %p99 = scmp.ne.s32.totalorder %s94, %s96
      %p100 = scmp.eq.s32.totalorder %s13, 0
      %p101 = por %p99, %p100
      %p102 = scmp.ne.s32.totalorder %s94, %s96
      %p103 = scmp.eq.s32.totalorder %s18, 1
      %p104 = por %p102, %p103
      %p105 = scmp.ne.s32.totalorder %s96, %s97
      %p106 = scmp.eq.s32.totalorder %s18, 0
      %p107 = por %p105, %p106
      %p108 = scmp.ne.s32.totalorder %s96, %s97
      %p109 = scmp.eq.s32.totalorder %s19, 1
      %p110 = por %p108, %p109
      %p112 = scmp.ne.s32.totalorder %s97, %s111
      %p113 = scmp.eq.s32.totalorder %s19, 0
      %p114 = por %p112, %p113
      %s115 = ssub.s32 %s13, %s20
      %p116 = scmp.eq.s32.totalorder %s115, 0
      %s118 = sadd.s32 %s117, 1
      %s119 = scalar_select %p116, %s117, %s118
      %p122 = pneg %p116
      %p123 = scmp.eq.s32.totalorder %s13, 1
      %p124 = por %p122, %p123
      %p125 = scmp.ne.s32.totalorder %s117, %s120
      %p126 = scmp.eq.s32.totalorder %s13, 0
      %p127 = por %p125, %p126
      %p128 = scmp.ne.s32.totalorder %s117, %s120
      %p129 = scmp.eq.s32.totalorder %s18, 1
      %p130 = por %p128, %p129
      %p131 = scmp.ne.s32.totalorder %s120, %s121
      %p132 = scmp.eq.s32.totalorder %s18, 0
      %p133 = por %p131, %p132
      %p134 = scmp.ne.s32.totalorder %s120, %s121
      %p135 = scmp.eq.s32.totalorder %s19, 1
      %p136 = por %p134, %p135
      %p138 = scmp.ne.s32.totalorder %s121, %s137
      %p139 = scmp.eq.s32.totalorder %s19, 0
      %p140 = por %p138, %p139
      %p141 = scmp.le.s32.totalorder 1, %s13
      %p142 = scmp.lt.s32.totalorder %s13, 3
      %p143 = pnand %p141, %p142
      %p144 = pneg %p143
      // Predicated region
      $region9: #{gcn_encoder_forward.1} parent=5 // pred_check
        _
      $region10: #{gcn_encoder_forward.1} parent=5 // pred_check_branch
        %146 = sbr.rel (%p143) target = $region12
      $region11: #{gcn_encoder_forward.1} parent=5 // pred_region
        %s147 = ssub.s32 %s13, 1
        // Predicated region
        $region13: #{gcn_encoder_forward.1} parent=11 // pred_check
          %p148 = pneg %p86
        $region14: #{gcn_encoder_forward.1} parent=11 // pred_check_branch
          %150 = sbr.rel (%p148) target = $region16
        $region15: #{gcn_encoder_forward.1} parent=11 // pred_region
          _
        $region16: #{gcn_encoder_forward.1} parent=11 // pred_fallthru
          _
        // Predicated region
        $region17: #{gcn_encoder_forward.1} parent=11 // pred_check
          %p151 = pneg %p107
        $region18: #{gcn_encoder_forward.1} parent=11 // pred_check_branch
          %153 = sbr.rel (%p151) target = $region20
        $region19: #{gcn_encoder_forward.1} parent=11 // pred_region
          _
        $region20: #{gcn_encoder_forward.1} parent=11 // pred_fallthru
          _
      $region12: #{gcn_encoder_forward.1} parent=5 // pred_fallthru
        _
      %p154 = scmp.lt.s32.totalorder %s13, 2
      // Predicated region
      $region21: #{gcn_encoder_forward.1} parent=5 // pred_check
        %p155 = pneg %p154
      $region22: #{gcn_encoder_forward.1} parent=5 // pred_check_branch
        %157 = sbr.rel (%p155) target = $region24
      $region23: #{gcn_encoder_forward.1} parent=5 // pred_region
        // Predicated region
        $region25: #{gcn_encoder_forward.1} parent=23 // pred_check
          %p158 = pneg %p33
        $region26: #{gcn_encoder_forward.1} parent=23 // pred_check_branch
          %160 = sbr.rel (%p158) target = $region28
        $region27: #{gcn_encoder_forward.1} parent=23 // pred_region
          %s161 = smul.u32 8, %s13
          %p162 = scmp.lt.s32.totalorder %s161, 15
          %s163 = scalar_select %p162, %s161, 15
          %s164 = smul.addr %s163, 4
          %s165 = scalar_lea.vmem %s0, %s164
          %s166 = smul.u32 8, %s13
        $region28: #{gcn_encoder_forward.1} parent=23 // pred_fallthru
          _
        // Predicated region
        $region29: #{gcn_encoder_forward.1} parent=23 // pred_check
          %p167 = pneg %p59
        $region30: #{gcn_encoder_forward.1} parent=23 // pred_check_branch
          %169 = sbr.rel (%p167) target = $region32
        $region31: #{gcn_encoder_forward.1} parent=23 // pred_region
          %s170 = smul.u32 8, %s13
          %p171 = scmp.lt.s32.totalorder %s170, 15
          %s172 = scalar_select %p171, %s170, 15
          %s173 = smul.addr %s172, 4
          %s174 = scalar_lea.vmem %s1, %s173
          %s175 = smul.u32 8, %s13
        $region32: #{gcn_encoder_forward.1} parent=23 // pred_fallthru
          _
      $region24: #{gcn_encoder_forward.1} parent=5 // pred_fallthru
        _
      %p176 = scmp.le.s32.totalorder 1, %s13
      %p177 = scmp.lt.s32.totalorder %s13, 3
      %p178 = pnand %p176, %p177
      %p179 = pneg %p178
      // Predicated region
      $region33: #{gcn_encoder_forward.1} parent=5 // pred_check
        _
      $region34: #{gcn_encoder_forward.1} parent=5 // pred_check_branch
        %181 = sbr.rel (%p178) target = $region36
      $region35: #{gcn_encoder_forward.1} parent=5 // pred_region
        %s182 = ssub.s32 %s13, 1
        %s183 = smul.u32 8, %s18
        %p184 = scmp.lt.s32.totalorder %s183, 15
        %s185 = scalar_select %p184, %s183, 15
        %s186 = smul.addr %s185, 4
        %s187 = scalar_lea.vmem %s0, %s186
        %p188 = pneg %p39
        %p189 = pneg %p36
        %s190 = smul.u32 8, %s18
        %p191 = scmp.lt.s32.totalorder %s190, 15
        %s192 = scalar_select %p191, %s190, 15
        %s193 = smul.addr %s192, 4
        %s194 = scalar_lea.vmem %s1, %s193
        %p195 = pneg %p65
        %p196 = pneg %p62
        %p197 = pneg %p86
        %p198 = pneg %p83
        %p199 = pneg %p107
        %p200 = pneg %p104
        %p201 = pneg %p133
        %p202 = pneg %p130
        %s203 = sand.u32 %s120, 1
        %s204 = scalar_lea.sflag [#allocation3], %s203
        %s205 = sand.u32 %s120, 1
        %s206 = smul.addr %s205, 64
        %s207 = scalar_lea.vmem [#allocation2], %s206
        %s208 = smul.u32 8, %s18
        %p209 = scmp.lt.s32.totalorder %s208, 15
        %s210 = scalar_select %p209, %s208, 15
        %s211 = smul.addr %s210, 4
        %s212 = scalar_lea.vmem %s0, %s211
        %s213 = smul.u32 8, %s18
        %s214 = smul.u32 8, %s18
        %p215 = scmp.lt.s32.totalorder %s214, 15
        %s216 = scalar_select %p215, %s214, 15
        %s217 = smul.addr %s216, 4
        %s218 = scalar_lea.vmem %s1, %s217
        %s219 = smul.u32 8, %s18
        %s220 = smul.u32 8, %s18
        %v222 = vld [vmem:[%s212] sm:$0xf]
        %v223 = vld [vmem:[%s212 + $0x4] sm:$0xf]
        %v224 = vld [vmem:[%s212 + $0x8] sm:$0xf]
        %v225 = vld [vmem:[%s212 + $0xc] sm:$0xf]
        %v226 = vld [vmem:[%s212 + $0x10] sm:$0xf]
        %v227 = vld [vmem:[%s212 + $0x14] sm:$0xf]
        %v228 = vld [vmem:[%s212 + $0x18] sm:$0xf]
        %v229 = vld [vmem:[%s212 + $0x1c] sm:$0xf]
        %v230 = vld [vmem:[%s218] sm:$0xf]
        %v231 = vld [vmem:[%s218 + $0x4] sm:$0xf]
        %v232 = vld [vmem:[%s218 + $0x8] sm:$0xf]
        %v233 = vld [vmem:[%s218 + $0xc] sm:$0xf]
        %v234 = vld [vmem:[%s218 + $0x10] sm:$0xf]
        %v235 = vld [vmem:[%s218 + $0x14] sm:$0xf]
        %v236 = vld [vmem:[%s218 + $0x18] sm:$0xf]
        %v237 = vld [vmem:[%s218 + $0x1c] sm:$0xf]
        %v246 = vunpack.c.l.b16 %v230
        %v247 = vunpack.c.l.b16 %v231
        %v248 = vunpack.c.l.b16 %v232
        %v249 = vunpack.c.l.b16 %v233
        %v250 = vunpack.c.l.b16 %v234
        %v251 = vunpack.c.l.b16 %v235
        %v252 = vunpack.c.l.b16 %v236
        %v253 = vunpack.c.l.b16 %v237
        %v254 = vpack.c.b16 %v247, %v246
        %v255 = vpack.c.b16 %v249, %v248
        %v256 = vpack.c.b16 %v251, %v250
        %v257 = vpack.c.b16 %v253, %v252
        %v266 = vunpack.c.l.b16 %v222
        %v267 = vunpack.c.l.b16 %v223
        %v268 = vunpack.c.l.b16 %v224
        %v269 = vunpack.c.l.b16 %v225
        %v270 = vunpack.c.l.b16 %v226
        %v271 = vunpack.c.l.b16 %v227
        %v272 = vunpack.c.l.b16 %v228
        %v273 = vunpack.c.l.b16 %v229
        %v274 = vpack.c.b16 %v267, %v266
        %v275 = vpack.c.b16 %v269, %v268
        %v276 = vpack.c.b16 %v271, %v270
        %v277 = vpack.c.b16 %v273, %v272
        %vm282 = vcmask 523264
        %v284 = vsel %vm282, %v254, 0
        %v287 = vsel %vm282, %v255, 0
        %v290 = vsel %vm282, %v256, 0
        %v293 = vsel %vm282, %v257, 0
        %295 = vmatprep.subr.bf16.mxu0 0
        %296 = vmatpush1.bf16.msra.mxu0 %v274
        %297 = vmatprep.subr.bf16.mxu0 0
        %298 = vmatpush1.bf16.msra.mxu0 %v275
        %299 = vmatprep.subr.bf16.mxu0 0
        %300 = vmatpush1.bf16.msra.mxu0 %v276
        %301 = vmatprep.subr.bf16.mxu0 0
        %302 = vmatpush1.bf16.msra.mxu0 %v277
        %303 = vmatprep.subr.bf16.mxu0 0
        %304 = vmatpush1.bf16.msra.mxu0 0
        %305 = vmatprep.subr.bf16.mxu0 0
        %306 = vmatpush1.bf16.msra.mxu0 0
        %307 = vmatprep.subr.bf16.mxu0 0
        %308 = vmatpush1.bf16.msra.mxu0 0
        %309 = vmatprep.subr.bf16.mxu0 0
        %310 = vmatpush1.bf16.msra.mxu0 0
        %311 = vmatprep.subr.bf16.mxu0 0
        %312 = vmatpush1.bf16.msra.mxu0 0
        %313 = vmatprep.subr.bf16.mxu0 0
        %314 = vmatpush1.bf16.msra.mxu0 0
        %315 = vmatprep.subr.bf16.mxu0 0
        %316 = vmatpush1.bf16.msra.mxu0 0
        %317 = vmatprep.subr.bf16.mxu0 0
        %318 = vmatpush1.bf16.msra.mxu0 0
        %319 = vmatprep.subr.bf16.mxu0 0
        %320 = vmatpush1.bf16.msra.mxu0 0
        %321 = vmatprep.subr.bf16.mxu0 0
        %322 = vmatpush1.bf16.msra.mxu0 0
        %323 = vmatprep.subr.bf16.mxu0 0
        %324 = vmatpush1.bf16.msra.mxu0 0
        %325 = vmatprep.subr.bf16.mxu0 0
        %326 = vmatpush1.bf16.msra.mxu0 0
        %327 = vmatprep.mubr.bf16.mxu0 0
        %328 = vmatmul.mubr.bf16.gmra.mrb[0].mxu0 %v284
        %v329 = vpop.f32.mrb[0].mxu0
        %v330 = vadd.f32 0.0, %v329
        %v331 = vpop.f32.mrb[0].mxu0
        %v332 = vpop.f32.mrb[0].mxu0
        %v333 = vadd.f32 0.0, %v332
        %v334 = vpop.f32.mrb[0].mxu0
        %335 = vmatprep.mubr.bf16.mxu0 0
        %336 = vmatmul.mubr.bf16.gmra.mrb[0].mxu0 %v287
        %v337 = vpop.f32.mrb[0].mxu0
        %v338 = vadd.f32 0.0, %v337
        %v339 = vpop.f32.mrb[0].mxu0
        %v340 = vpop.f32.mrb[0].mxu0
        %v341 = vadd.f32 0.0, %v340
        %v342 = vpop.f32.mrb[0].mxu0
        %343 = vmatprep.mubr.bf16.mxu0 0
        %344 = vmatmul.mubr.bf16.gmra.mrb[0].mxu0 %v290
        %v345 = vpop.f32.mrb[0].mxu0
        %v346 = vadd.f32 0.0, %v345
        %v347 = vpop.f32.mrb[0].mxu0
        %v348 = vpop.f32.mrb[0].mxu0
        %v349 = vadd.f32 0.0, %v348
        %v350 = vpop.f32.mrb[0].mxu0
        %351 = vmatprep.mubr.bf16.mxu0 0
        %352 = vmatmul.mubr.bf16.gmra.mrb[0].mxu0 %v293
        %v353 = vpop.f32.mrb[0].mxu0
        %v354 = vadd.f32 0.0, %v353
        %v355 = vpop.f32.mrb[0].mxu0
        %v356 = vpop.f32.mrb[0].mxu0
        %v357 = vadd.f32 0.0, %v356
        %v358 = vpop.f32.mrb[0].mxu0
        %359 = vdwg.mxu0
        %v360 = vpack.c.bf16 %v333, %v330
        %v361 = vpack.c.bf16 %v341, %v338
        %v362 = vpack.c.bf16 %v349, %v346
        %v363 = vpack.c.bf16 %v357, %v354
        %v364 = vld [vmem:[%s2] sm:$0xf]
        %v365 = vld [vmem:[%s2 + $0x4] sm:$0xf]
        %v368 = vunpack.c.l.b16 %v364
        %v369 = vunpack.c.l.b16 %v365
        %v370 = vpack.c.b16 %v369, %v368
        %vm372 = vcmask 130048
        %v374 = vsel %vm372, %v360, 0
        %v377 = vsel %vm372, %v361, 0
        %v380 = vsel %vm372, %v362, 0
        %v383 = vsel %vm372, %v363, 0
        %385 = vmatprep.subr.bf16.mxu0 0
        %386 = vmatpush1.bf16.msra.mxu0 %v370
        %387 = vmatprep.subr.bf16.mxu0 0
        %388 = vmatpush1.bf16.msra.mxu0 0
        %389 = vmatprep.subr.bf16.mxu0 0
        %390 = vmatpush1.bf16.msra.mxu0 0
        %391 = vmatprep.subr.bf16.mxu0 0
        %392 = vmatpush1.bf16.msra.mxu0 0
        %393 = vmatprep.subr.bf16.mxu0 0
        %394 = vmatpush1.bf16.msra.mxu0 0
        %395 = vmatprep.subr.bf16.mxu0 0
        %396 = vmatpush1.bf16.msra.mxu0 0
        %397 = vmatprep.subr.bf16.mxu0 0
        %398 = vmatpush1.bf16.msra.mxu0 0
        %399 = vmatprep.subr.bf16.mxu0 0
        %400 = vmatpush1.bf16.msra.mxu0 0
        %401 = vmatprep.subr.bf16.mxu0 0
        %402 = vmatpush1.bf16.msra.mxu0 0
        %403 = vmatprep.subr.bf16.mxu0 0
        %404 = vmatpush1.bf16.msra.mxu0 0
        %405 = vmatprep.subr.bf16.mxu0 0
        %406 = vmatpush1.bf16.msra.mxu0 0
        %407 = vmatprep.subr.bf16.mxu0 0
        %408 = vmatpush1.bf16.msra.mxu0 0
        %409 = vmatprep.subr.bf16.mxu0 0
        %410 = vmatpush1.bf16.msra.mxu0 0
        %411 = vmatprep.subr.bf16.mxu0 0
        %412 = vmatpush1.bf16.msra.mxu0 0
        %413 = vmatprep.subr.bf16.mxu0 0
        %414 = vmatpush1.bf16.msra.mxu0 0
        %415 = vmatprep.subr.bf16.mxu0 0
        %416 = vmatpush1.bf16.msra.mxu0 0
        %417 = vmatprep.mubr.bf16.mxu0 0
        %418 = vmatmul.mubr.bf16.gmra.mrb[0].mxu0 %v374
        %v419 = vpop.f32.mrb[0].mxu0
        %v420 = vadd.f32 0.0, %v419
        %v421 = vpop.f32.mrb[0].mxu0
        %v422 = vpop.f32.mrb[0].mxu0
        %v423 = vadd.f32 0.0, %v422
        %v424 = vpop.f32.mrb[0].mxu0
        %425 = vmatprep.mubr.bf16.mxu0 0
        %426 = vmatmul.mubr.bf16.gmra.mrb[0].mxu0 %v377
        %v427 = vpop.f32.mrb[0].mxu0
        %v428 = vadd.f32 0.0, %v427
        %v429 = vpop.f32.mrb[0].mxu0
        %v430 = vpop.f32.mrb[0].mxu0
        %v431 = vadd.f32 0.0, %v430
        %v432 = vpop.f32.mrb[0].mxu0
        %433 = vmatprep.mubr.bf16.mxu0 0
        %434 = vmatmul.mubr.bf16.gmra.mrb[0].mxu0 %v380
        %v435 = vpop.f32.mrb[0].mxu0
        %v436 = vadd.f32 0.0, %v435
        %v437 = vpop.f32.mrb[0].mxu0
        %v438 = vpop.f32.mrb[0].mxu0
        %v439 = vadd.f32 0.0, %v438
        %v440 = vpop.f32.mrb[0].mxu0
        %441 = vmatprep.mubr.bf16.mxu0 0
        %442 = vmatmul.mubr.bf16.gmra.mrb[0].mxu0 %v383
        %v443 = vpop.f32.mrb[0].mxu0
        %v444 = vadd.f32 0.0, %v443
        %v445 = vpop.f32.mrb[0].mxu0
        %v446 = vpop.f32.mrb[0].mxu0
        %v447 = vadd.f32 0.0, %v446
        %v448 = vpop.f32.mrb[0].mxu0
        %449 = vdwg.mxu0
        %v450 = vmax.f32 %v420, 0.0
        %v451 = vmax.f32 %v423, 0.0
        %v452 = vmax.f32 %v428, 0.0
        %v453 = vmax.f32 %v431, 0.0
        %v454 = vmax.f32 %v436, 0.0
        %v455 = vmax.f32 %v439, 0.0
        %v456 = vmax.f32 %v444, 0.0
        %v457 = vmax.f32 %v447, 0.0
        %v458 = vpack.c.bf16 %v451, %v450
        %v459 = vpack.c.bf16 %v453, %v452
        %v460 = vpack.c.bf16 %v455, %v454
        %v461 = vpack.c.bf16 %v457, %v456
        %462 = vmatprep.subr.bf16.mxu0 0
        %463 = vmatpush1.bf16.msra.mxu0 %v458
        %464 = vmatprep.subr.bf16.mxu0 0
        %465 = vmatpush1.bf16.msra.mxu0 %v459
        %466 = vmatprep.subr.bf16.mxu0 0
        %467 = vmatpush1.bf16.msra.mxu0 %v460
        %468 = vmatprep.subr.bf16.mxu0 0
        %469 = vmatpush1.bf16.msra.mxu0 %v461
        %470 = vmatprep.subr.bf16.mxu0 0
        %471 = vmatpush1.bf16.msra.mxu0 0
        %472 = vmatprep.subr.bf16.mxu0 0
        %473 = vmatpush1.bf16.msra.mxu0 0
        %474 = vmatprep.subr.bf16.mxu0 0
        %475 = vmatpush1.bf16.msra.mxu0 0
        %476 = vmatprep.subr.bf16.mxu0 0
        %477 = vmatpush1.bf16.msra.mxu0 0
        %478 = vmatprep.subr.bf16.mxu0 0
        %479 = vmatpush1.bf16.msra.mxu0 0
        %480 = vmatprep.subr.bf16.mxu0 0
        %481 = vmatpush1.bf16.msra.mxu0 0
        %482 = vmatprep.subr.bf16.mxu0 0
        %483 = vmatpush1.bf16.msra.mxu0 0
        %484 = vmatprep.subr.bf16.mxu0 0
        %485 = vmatpush1.bf16.msra.mxu0 0
        %486 = vmatprep.subr.bf16.mxu0 0
        %487 = vmatpush1.bf16.msra.mxu0 0
        %488 = vmatprep.subr.bf16.mxu0 0
        %489 = vmatpush1.bf16.msra.mxu0 0
        %490 = vmatprep.subr.bf16.mxu0 0
        %491 = vmatpush1.bf16.msra.mxu0 0
        %492 = vmatprep.subr.bf16.mxu0 0
        %493 = vmatpush1.bf16.msra.mxu0 0
        %494 = vmatprep.mubr.bf16.mxu0 0
        %495 = vmatmul.mubr.bf16.gmra.mrb[0].mxu0 %v284
        %v496 = vpop.f32.mrb[0].mxu0
        %v497 = vadd.f32 0.0, %v496
        %v498 = vpop.f32.mrb[0].mxu0
        %v499 = vpop.f32.mrb[0].mxu0
        %v500 = vadd.f32 0.0, %v499
        %v501 = vpop.f32.mrb[0].mxu0
        %502 = vmatprep.mubr.bf16.mxu0 0
        %503 = vmatmul.mubr.bf16.gmra.mrb[0].mxu0 %v287
        %v504 = vpop.f32.mrb[0].mxu0
        %v505 = vadd.f32 0.0, %v504
        %v506 = vpop.f32.mrb[0].mxu0
        %v507 = vpop.f32.mrb[0].mxu0
        %v508 = vadd.f32 0.0, %v507
        %v509 = vpop.f32.mrb[0].mxu0
        %510 = vmatprep.mubr.bf16.mxu0 0
        %511 = vmatmul.mubr.bf16.gmra.mrb[0].mxu0 %v290
        %v512 = vpop.f32.mrb[0].mxu0
        %v513 = vadd.f32 0.0, %v512
        %v514 = vpop.f32.mrb[0].mxu0
        %v515 = vpop.f32.mrb[0].mxu0
        %v516 = vadd.f32 0.0, %v515
        %v517 = vpop.f32.mrb[0].mxu0
        %518 = vmatprep.mubr.bf16.mxu0 0
        %519 = vmatmul.mubr.bf16.gmra.mrb[0].mxu0 %v293
        %v520 = vpop.f32.mrb[0].mxu0
        %v521 = vadd.f32 0.0, %v520
        %v522 = vpop.f32.mrb[0].mxu0
        %v523 = vpop.f32.mrb[0].mxu0
        %v524 = vadd.f32 0.0, %v523
        %v525 = vpop.f32.mrb[0].mxu0
        %526 = vdwg.mxu0
        %v527 = vpack.c.bf16 %v500, %v497
        %v528 = vpack.c.bf16 %v508, %v505
        %v529 = vpack.c.bf16 %v516, %v513
        %v530 = vpack.c.bf16 %v524, %v521
        %v531 = vld [vmem:[%s3] sm:$0xf]
        %v532 = vld [vmem:[%s3 + $0x4] sm:$0xf]
        %v533 = vld [vmem:[%s3 + $0x8] sm:$0xf]
        %v534 = vld [vmem:[%s3 + $0xc] sm:$0xf]
        %v539 = vunpack.c.l.b16 %v531
        %v540 = vunpack.c.l.b16 %v532
        %v541 = vunpack.c.l.b16 %v533
        %v542 = vunpack.c.l.b16 %v534
        %v543 = vpack.c.b16 %v540, %v539
        %v544 = vpack.c.b16 %v542, %v541
        %vm547 = vcmask 261120
        %v549 = vsel %vm547, %v527, 0
        %v552 = vsel %vm547, %v528, 0
        %v555 = vsel %vm547, %v529, 0
        %v558 = vsel %vm547, %v530, 0
        %560 = vmatprep.subr.bf16.mxu0 0
        %561 = vmatpush1.bf16.msra.mxu0 %v543
        %562 = vmatprep.subr.bf16.mxu0 0
        %563 = vmatpush1.bf16.msra.mxu0 %v544
        %564 = vmatprep.subr.bf16.mxu0 0
        %565 = vmatpush1.bf16.msra.mxu0 0
        %566 = vmatprep.subr.bf16.mxu0 0
        %567 = vmatpush1.bf16.msra.mxu0 0
        %568 = vmatprep.subr.bf16.mxu0 0
        %569 = vmatpush1.bf16.msra.mxu0 0
        %570 = vmatprep.subr.bf16.mxu0 0
        %571 = vmatpush1.bf16.msra.mxu0 0
        %572 = vmatprep.subr.bf16.mxu0 0
        %573 = vmatpush1.bf16.msra.mxu0 0
        %574 = vmatprep.subr.bf16.mxu0 0
        %575 = vmatpush1.bf16.msra.mxu0 0
        %576 = vmatprep.subr.bf16.mxu0 0
        %577 = vmatpush1.bf16.msra.mxu0 0
        %578 = vmatprep.subr.bf16.mxu0 0
        %579 = vmatpush1.bf16.msra.mxu0 0
        %580 = vmatprep.subr.bf16.mxu0 0
        %581 = vmatpush1.bf16.msra.mxu0 0
        %582 = vmatprep.subr.bf16.mxu0 0
        %583 = vmatpush1.bf16.msra.mxu0 0
        %584 = vmatprep.subr.bf16.mxu0 0
        %585 = vmatpush1.bf16.msra.mxu0 0
        %586 = vmatprep.subr.bf16.mxu0 0
        %587 = vmatpush1.bf16.msra.mxu0 0
        %588 = vmatprep.subr.bf16.mxu0 0
        %589 = vmatpush1.bf16.msra.mxu0 0
        %590 = vmatprep.subr.bf16.mxu0 0
        %591 = vmatpush1.bf16.msra.mxu0 0
        %592 = vmatprep.mubr.bf16.mxu0 0
        %593 = vmatmul.mubr.bf16.gmra.mrb[0].mxu0 %v549
        %v594 = vpop.f32.mrb[0].mxu0
        %v595 = vadd.f32 0.0, %v594
        %v596 = vpop.f32.mrb[0].mxu0
        %v597 = vpop.f32.mrb[0].mxu0
        %v598 = vadd.f32 0.0, %v597
        %v599 = vpop.f32.mrb[0].mxu0
        %600 = vmatprep.mubr.bf16.mxu0 0
        %601 = vmatmul.mubr.bf16.gmra.mrb[0].mxu0 %v552
        %v602 = vpop.f32.mrb[0].mxu0
        %v603 = vadd.f32 0.0, %v602
        %v604 = vpop.f32.mrb[0].mxu0
        %v605 = vpop.f32.mrb[0].mxu0
        %v606 = vadd.f32 0.0, %v605
        %v607 = vpop.f32.mrb[0].mxu0
        %608 = vmatprep.mubr.bf16.mxu0 0
        %609 = vmatmul.mubr.bf16.gmra.mrb[0].mxu0 %v555
        %v610 = vpop.f32.mrb[0].mxu0
        %v611 = vadd.f32 0.0, %v610
        %v612 = vpop.f32.mrb[0].mxu0
        %v613 = vpop.f32.mrb[0].mxu0
        %v614 = vadd.f32 0.0, %v613
        %v615 = vpop.f32.mrb[0].mxu0
        %616 = vmatprep.mubr.bf16.mxu0 0
        %617 = vmatmul.mubr.bf16.gmra.mrb[0].mxu0 %v558
        %v618 = vpop.f32.mrb[0].mxu0
        %v619 = vadd.f32 0.0, %v618
        %v620 = vpop.f32.mrb[0].mxu0
        %v621 = vpop.f32.mrb[0].mxu0
        %v622 = vadd.f32 0.0, %v621
        %v623 = vpop.f32.mrb[0].mxu0
        %624 = vdwg.mxu0
        %625 = vst [vmem:[%s207] sm:$0xff] %v595
        %626 = vst [vmem:[%s207 + $0x8] sm:$0xff] %v598
        %627 = vst [vmem:[%s207 + $0x10] sm:$0xff] %v603
        %628 = vst [vmem:[%s207 + $0x18] sm:$0xff] %v606
        %629 = vst [vmem:[%s207 + $0x20] sm:$0xff] %v611
        %630 = vst [vmem:[%s207 + $0x28] sm:$0xff] %v614
        %631 = vst [vmem:[%s207 + $0x30] sm:$0xff] %v619
        %632 = vst [vmem:[%s207 + $0x38] sm:$0xff] %v622
        %s633 = sand.u32 %s120, 1
        %s634 = scalar_lea.sflag [#allocation3], %s633
        %s635 = sand.u32 %s120, 1
        %s636 = smul.addr %s635, 64
        %s637 = scalar_lea.vmem [#allocation2], %s636
        // Predicated region
        $region37: #{gcn_encoder_forward.1} parent=35 // pred_check
          %p638 = pneg %p130
        $region38: #{gcn_encoder_forward.1} parent=35 // pred_check_branch
          %640 = sbr.rel (%p638) target = $region40
        $region39: #{gcn_encoder_forward.1} parent=35 // pred_region
          %s641 = smul.u32 8, %s18
          %s643 = ssub.s32 1024, 1024
          %644 = vsyncadd %s634, %s643
          %s645 = smul.addr %s641, 128
          %s646 = scalar_lea.hbm %s4, %s645
          %s647 = sshll.u32 %s637, 4
          %s648 = int_to_ptr.vmem [resolvable:$true] %s647
          %653 = dma.vmem_to_hbm [thread:$0]  %s648, 1024, %s646, %s634, 128, 128, 8
        $region40: #{gcn_encoder_forward.1} parent=35 // pred_fallthru
          _
      $region36: #{gcn_encoder_forward.1} parent=5 // pred_fallthru
        _
      %p654 = scmp.le.s32.totalorder 2, %s13
      // Predicated region
      $region41: #{gcn_encoder_forward.1} parent=5 // pred_check
        %p655 = pneg %p654
      $region42: #{gcn_encoder_forward.1} parent=5 // pred_check_branch
        %657 = sbr.rel (%p655) target = $region44
      $region43: #{gcn_encoder_forward.1} parent=5 // pred_region
        %s658 = ssub.s32 %s13, 2
        // Predicated region
        $region45: #{gcn_encoder_forward.1} parent=43 // pred_check
          %p659 = pneg %p136
        $region46: #{gcn_encoder_forward.1} parent=43 // pred_check_branch
          %661 = sbr.rel (%p659) target = $region48
        $region47: #{gcn_encoder_forward.1} parent=43 // pred_region
          %s662 = sand.u32 %s121, 1
          %s663 = scalar_lea.sflag [#allocation3], %s662
          %s664 = sand.u32 %s121, 1
          %s665 = smul.addr %s664, 64
          %s666 = scalar_lea.vmem [#allocation2], %s665
          %667 = dma.done %s663, 1024
        $region48: #{gcn_encoder_forward.1} parent=43 // pred_fallthru
          _
      $region44: #{gcn_encoder_forward.1} parent=5 // pred_fallthru
        _
    $region6: #{gcn_encoder_forward.1} parent=1 // loop_footer
      %s17 = sadd.s32 1, %s13
    $region7: #{gcn_encoder_forward.1} parent=1 // loop_footer_branch
      %12 = sbr.rel target = $region3
    $region8: #{gcn_encoder_forward.1} parent=1 // loop_exit
      _
    %668 = vsyncpa [#allocation3], 1
    %s669 = scalar_lea.sflag [#allocation3], 1
    %670 = vsyncpa %s669, 1

</llo_original>
